<compile_context>
chip_gen: v7x
topology: tpu7x:2x2x1
jax: 0.10.0
libtpu: 0.0.40
codegen_flags: <defaults>
</compile_context>

<pallas_src>
import jax
import jax.numpy as jnp
from jax.experimental import pallas as pl
from jax.experimental.pallas import tpu as pltpu


# ---------------------------------------------------------------------------
# Kernels
# ---------------------------------------------------------------------------
def _ffn_step(x_ref, wg_ref, w2_ref):
    """One (token-tile, hidden-tile) step; returns f32 partial [tile_t, Dp]."""
    x = x_ref[...]                                   # [tt, Dp]
    th = w2_ref.shape[0]                             # hidden tile size (static)
    # Fused gate/up projection: single MXU pass over the concatenated tile.
    hg = jnp.dot(x, wg_ref[...], preferred_element_type=jnp.float32)  # [tt, 2*th]
    h1 = hg[:, :th]
    h3 = hg[:, th:]
    prod = h1 * h3
    act = prod * jax.nn.sigmoid(prod)                # silu(w1(x) * w3(x)), as in module
    return jnp.dot(act.astype(w2_ref.dtype), w2_ref[...],
                   preferred_element_type=jnp.float32)                # [tt, Dp]


def _ffn_kernel_out_acc(x_ref, wg_ref, w2_ref, o_ref):
    """f32 output: accumulate directly into the resident output block."""
    k = pl.program_id(1)

    @pl.when(k == 0)
    def _():
        o_ref[...] = jnp.zeros_like(o_ref)

    o_ref[...] += _ffn_step(x_ref, wg_ref, w2_ref)


def _ffn_kernel_scratch_acc(x_ref, wg_ref, w2_ref, o_ref, acc_ref):
    """Non-f32 output (e.g. bf16): f32 scratch accumulator, one final downcast."""
    k = pl.program_id(1)

    @pl.when(k == 0)
    def _():
        acc_ref[...] = jnp.zeros_like(acc_ref)

    acc_ref[...] += _ffn_step(x_ref, wg_ref, w2_ref)

    @pl.when(k == pl.num_programs(1) - 1)
    def _():
        o_ref[...] = acc_ref[...].astype(o_ref.dtype)


# ---------------------------------------------------------------------------
# Wrapper
# ---------------------------------------------------------------------------
def _round_up(x, m):
    return ((x + m - 1) // m) * m


def _vmem_capacity_bytes():
    """Physical VMEM per TensorCore; conservative fallback (v7x = 64 MiB)."""
    try:
        info = pltpu.get_tpu_info()
        cap = getattr(info, "vmem_capacity_bytes", None)
        if cap:
            return int(cap)
    except Exception:
        pass
    return 64 * 1024 * 1024


def _default_tiles(vmem_cap):
    if vmem_cap <= 80 * 1024 * 1024:
        # v7x-class (64 MiB/TC): compute/BW knee ~310 FLOP/byte, keep VMEM headroom.
        return 384, 512
    # v5e / v6e class (128 MiB): v6e needs ~640+ token rows to be MXU-bound.
    return 640, 512


def feed_forward_pallas(x, w1, w3, w2, *, tile_t=None, tile_h=None,
                        compute_dtype=None, vmem_limit_bytes=None):
    """x: [B, S, D]; w1/w3: [D, H]; w2: [H, D] (already transposed vs torch).

    compute_dtype: optionally cast x / weights (e.g. jnp.bfloat16) for the
    bf16-native MXU; accumulation is f32 either way.  Output dtype == x.dtype.
    """
    B, S, D = x.shape
    H = w1.shape[1]
    assert w1.shape == (D, H) and w3.shape == (D, H) and w2.shape == (H, D)

    T = B * S
    out_dtype = x.dtype
    cdt = jnp.dtype(compute_dtype) if compute_dtype is not None else jnp.dtype(x.dtype)

    vmem_cap = _vmem_capacity_bytes()
    dt_t, dt_h = _default_tiles(vmem_cap)
    tile_t = dt_t if tile_t is None else tile_t
    tile_h = dt_h if tile_h is None else tile_h

    # ---- tile / pad geometry ------------------------------------------------
    Dp = _round_up(D, 128)                      # lane-dense last dim
    tile_h = min(tile_h, _round_up(H, 128))
    n_k = pl.cdiv(H, tile_h)
    Hp = n_k * tile_h

    tile_t = min(tile_t, _round_up(T, 8))
    n_t = pl.cdiv(T, tile_t)
    if n_t == 1 and T > 8:
        # Guarantee >= 2 token tiles so both v7x TensorCores (parallel axis) work.
        tile_t = _round_up(pl.cdiv(T, 2), 8)
        n_t = pl.cdiv(T, tile_t)
    Tp = n_t * tile_t

    # ---- prepare (cast / pad / fuse) inputs ---------------------------------
    # TODO(synk): in a real model, fuse/pad the weights once at load time
    # instead of per call.
    x2d = x.reshape(T, D).astype(cdt)
    if (Tp, Dp) != (T, D):
        x2d = jnp.pad(x2d, ((0, Tp - T), (0, Dp - D)))

    def _pad2(w, rows, cols):
        r, c = w.shape
        if (rows, cols) != (r, c):
            w = jnp.pad(w, ((0, rows - r), (0, cols - c)))
        return w

    w1p = _pad2(w1.astype(cdt), Dp, Hp)
    w3p = _pad2(w3.astype(cdt), Dp, Hp)
    w2p = _pad2(w2.astype(cdt), Hp, Dp)

    # Fuse gate/up weights so hidden-tile k is [w1_k | w3_k] contiguously:
    # block k of wg[:, k*2*th:(k+1)*2*th] = concat(w1[:,k*th:(k+1)*th], w3[:, ...]).
    wg = jnp.stack([w1p.reshape(Dp, n_k, tile_h),
                    w3p.reshape(Dp, n_k, tile_h)], axis=2).reshape(Dp, 2 * Hp)

    # ---- specs --------------------------------------------------------------
    in_specs = [
        pl.BlockSpec((tile_t, Dp), lambda i, k: (i, 0)),       # x token tile (const in k)
        pl.BlockSpec((Dp, 2 * tile_h), lambda i, k: (0, k)),   # fused [w1|w3] hidden tile
        pl.BlockSpec((tile_h, Dp), lambda i, k: (k, 0)),       # w2 hidden tile
    ]
    out_spec = pl.BlockSpec((tile_t, Dp), lambda i, k: (i, 0))

    use_scratch = out_dtype != jnp.float32
    kernel = _ffn_kernel_scratch_acc if use_scratch else _ffn_kernel_out_acc
    scratch_shapes = [pltpu.VMEM((tile_t, Dp), jnp.float32)] if use_scratch else []

    # ---- VMEM budget (clamped to physical capacity minus headroom) ----------
    c_itm = cdt.itemsize
    o_itm = jnp.dtype(out_dtype).itemsize
    blk_in = (tile_t * Dp + Dp * 2 * tile_h + tile_h * Dp) * c_itm
    blk_out = tile_t * Dp * o_itm
    blk_acc = tile_t * Dp * 4 if use_scratch else 0
    if vmem_limit_bytes is None:
        est = 2 * blk_in + 2 * blk_out + blk_acc
        vmem_limit_bytes = min(vmem_cap - 8 * 1024 * 1024,
                               max(32 * 1024 * 1024, int(est * 1.3)))

    # Advisory cost estimate (weights re-streamed once per token tile).
    cost = pl.CostEstimate(
        flops=6 * Tp * Dp * Hp,                       # 3 matmuls x 2*T*D*H
        transcendentals=Tp * Hp,                      # sigmoid
        bytes_accessed=(Tp * Dp * c_itm
                        + n_t * (wg.size + w2p.size) * c_itm
                        + Tp * Dp * o_itm),
    )

    out2d = pl.pallas_call(
        kernel,
        out_shape=jax.ShapeDtypeStruct((Tp, Dp), out_dtype),
        grid_spec=pltpu.PrefetchScalarGridSpec(
            num_scalar_prefetch=0,
            grid=(n_t, n_k),                          # reduction (hidden) axis last
            in_specs=in_specs,
            out_specs=out_spec,
            scratch_shapes=scratch_shapes,
        ),
        compiler_params=pltpu.CompilerParams(
            dimension_semantics=("parallel", "arbitrary"),
            vmem_limit_bytes=vmem_limit_bytes,
        ),
        cost_estimate=cost,
    )(x2d, wg, w2p)

    return out2d[:T, :D].reshape(B, S, D)


# ---------------------------------------------------------------------------
# Reference + helpers
# ---------------------------------------------------------------------------
def llama_hidden_dim(hidden_dim, multiple_of, ffn_dim_multiplier):
    hidden_dim = int(2 * hidden_dim / 3)
    if ffn_dim_multiplier is not None:
        hidden_dim = int(ffn_dim_multiplier * hidden_dim)
    return multiple_of * ((hidden_dim + multiple_of - 1) // multiple_of)


def feed_forward_ref(x, w1, w3, w2):
    xf = x.astype(jnp.float32)
    h = (jnp.einsum("bsd,dh->bsh", xf, w1.astype(jnp.float32))
         * jnp.einsum("bsd,dh->bsh", xf, w3.astype(jnp.float32)))
    act = h * jax.nn.sigmoid(h)
    return jnp.einsum("bsh,hd->bsd", act, w2.astype(jnp.float32))


if __name__ == "__main__":
    # Module config (small): dim=64, hidden_dim=256, multiple_of=128, mult=None
    dim = 64
    hidden = llama_hidden_dim(256, 128, None)     # -> 256
    batch, seq = 2, 8

    key = jax.random.PRNGKey(0)
    kx, k1, k2, k3 = jax.random.split(key, 4)
    x = jax.random.normal(kx, (batch, seq, dim), dtype=jnp.float32)
    # nn.Linear(dim, hidden).weight is [hidden, dim]; store transposed [dim, hidden]
    w1 = (jax.random.normal(k1, (hidden, dim), dtype=jnp.float32) * 0.02).T
    w3 = (jax.random.normal(k3, (hidden, dim), dtype=jnp.float32) * 0.02).T
    # nn.Linear(hidden, dim).weight is [dim, hidden]; store transposed [hidden, dim]
    w2 = (jax.random.normal(k2, (dim, hidden), dtype=jnp.float32) * 0.02).T

    ref = feed_forward_ref(x, w1, w3, w2)

    # ---- f32 path (exact, direct accumulation into output block) ----
    out = jax.block_until_ready(feed_forward_pallas(x, w1, w3, w2))
    assert out.shape == (batch, seq, dim)
    assert jnp.allclose(out, ref, atol=1e-5, rtol=1e-5), "f32 mismatch vs reference"

    # ---- f32 inputs, bf16 MXU compute (f32 accumulation) ----
    out_mixed = jax.block_until_ready(
        feed_forward_pallas(x, w1, w3, w2, compute_dtype=jnp.bfloat16))
    assert out_mixed.dtype == jnp.float32
    assert jnp.allclose(out_mixed, ref, atol=5e-3, rtol=5e-2), \
        "bf16-compute mismatch vs reference"

    # ---- pure bf16 path (bf16 in/out, f32 scratch accumulator) ----
    xb, w1b, w3b, w2b = (a.astype(jnp.bfloat16) for a in (x, w1, w3, w2))
    out_bf = jax.block_until_ready(feed_forward_pallas(xb, w1b, w3b, w2b))
    ref_bf = feed_forward_ref(xb, w1b, w3b, w2b)
    assert out_bf.dtype == jnp.bfloat16
    assert jnp.allclose(out_bf.astype(jnp.float32), ref_bf, atol=5e-3, rtol=5e-2), \
        "bf16 mismatch vs reference"

    print("KERNEL_OK")
</pallas_src>

<mosaic_0001>
module attributes {stable_mosaic.version = 11 : i64} {
  func.func @_ffn_kernel_out_acc(%arg0: i32, %arg1: i32, %arg2: memref<8x128xf32, #tpu.memory_space<vmem>>, %arg3: memref<128x512xf32, #tpu.memory_space<vmem>>, %arg4: memref<256x128xf32, #tpu.memory_space<vmem>>, %arg5: memref<8x128xf32, #tpu.memory_space<vmem>>) attributes {dimension_semantics = [#tpu.dimension_semantics<parallel>, #tpu.dimension_semantics<arbitrary>], iteration_bounds = array<i64: 2, 1>, scalar_prefetch = 0 : i64, scratch_operands = 0 : i64, tpu.core_type = #tpu.core_type<tc>, window_params = [{transform_indices = @transform_0, window_bounds = array<i64: 8, 128>}, {transform_indices = @transform_1, window_bounds = array<i64: 128, 512>}, {transform_indices = @transform_2, window_bounds = array<i64: 256, 128>}, {transform_indices = @transform_3, window_bounds = array<i64: 8, 128>}]} {
    %c0_i32 = arith.constant 0 : i32
    %0 = arith.cmpi eq, %arg1, %c0_i32 : i32
    %1 = arith.extui %0 : i1 to i32
    %c0_i32_0 = arith.constant 0 : i32
    %2 = arith.cmpi ne, %1, %c0_i32_0 : i32
    scf.if %2 {
      %cst_12 = arith.constant 0.000000e+00 : f32
      %20 = vector.broadcast %cst_12 : f32 to vector<8x128xf32>
      %c0_13 = arith.constant 0 : index
      %c0_14 = arith.constant 0 : index
      %21 = vector.load %arg5[%c0_13, %c0_14] : memref<8x128xf32, #tpu.memory_space<vmem>>, vector<8x128xf32>
      tpu.vector_store %arg5[%c0_13, %c0_14], %20 {strides = array<i32>} : memref<8x128xf32, #tpu.memory_space<vmem>>, vector<8x128xf32>,
    } else {
    }
    %c0 = arith.constant 0 : index
    %c0_1 = arith.constant 0 : index
    %3 = vector.load %arg5[%c0, %c0_1] : memref<8x128xf32, #tpu.memory_space<vmem>>, vector<8x128xf32>
    %c0_2 = arith.constant 0 : index
    %c0_3 = arith.constant 0 : index
    %4 = vector.load %arg2[%c0_2, %c0_3] : memref<8x128xf32, #tpu.memory_space<vmem>>, vector<8x128xf32>
    %c0_4 = arith.constant 0 : index
    %c0_5 = arith.constant 0 : index
    %5 = vector.load %arg3[%c0_4, %c0_5] : memref<128x512xf32, #tpu.memory_space<vmem>>, vector<128x512xf32>
    %cst = arith.constant dense<0.000000e+00> : vector<8x512xf32>
    %6 = tpu.matmul %4, %5, %cst {dimension_numbers = #tpu.dot_dimension_numbers<[1], [0], [0], [1], [0, 0, 1, 1], [], []>} : vector<8x128xf32>, vector<128x512xf32>, vector<8x512xf32> -> vector<8x512xf32>
    %7 = vector.extract_strided_slice %6 {offsets = [0, 0], sizes = [8, 256], strides = [1, 1]} : vector<8x512xf32> to vector<8x256xf32>
    %8 = vector.extract_strided_slice %6 {offsets = [0, 256], sizes = [8, 256], strides = [1, 1]} : vector<8x512xf32> to vector<8x256xf32>
    %9 = arith.mulf %7, %8 : vector<8x256xf32>
    %10 = arith.negf %9 : vector<8x256xf32>
    %11 = math.exp %10 : vector<8x256xf32>
    %cst_6 = arith.constant 1.000000e+00 : f32
    %12 = vector.broadcast %cst_6 : f32 to vector<8x256xf32>
    %13 = arith.addf %12, %11 : vector<8x256xf32>
    %14 = arith.divf %12, %13 : vector<8x256xf32>
    %15 = arith.mulf %9, %14 : vector<8x256xf32>
    %c0_7 = arith.constant 0 : index
    %c0_8 = arith.constant 0 : index
    %16 = vector.load %arg4[%c0_7, %c0_8] : memref<256x128xf32, #tpu.memory_space<vmem>>, vector<256x128xf32>
    %cst_9 = arith.constant dense<0.000000e+00> : vector<8x128xf32>
    %17 = tpu.matmul %15, %16, %cst_9 {dimension_numbers = #tpu.dot_dimension_numbers<[1], [0], [0], [1], [0, 0, 1, 1], [], []>} : vector<8x256xf32>, vector<256x128xf32>, vector<8x128xf32> -> vector<8x128xf32>
    %18 = arith.addf %3, %17 : vector<8x128xf32>
    %c0_10 = arith.constant 0 : index
    %c0_11 = arith.constant 0 : index
    %19 = vector.load %arg5[%c0_10, %c0_11] : memref<8x128xf32, #tpu.memory_space<vmem>>, vector<8x128xf32>
    tpu.vector_store %arg5[%c0_10, %c0_11], %18 {strides = array<i32>} : memref<8x128xf32, #tpu.memory_space<vmem>>, vector<8x128xf32>,
    return
  }
  func.func @transform_0(%arg0: i32, %arg1: i32) -> (i32, i32) {
    %c0_i32 = arith.constant 0 : i32
    %c0_i32_0 = arith.constant 0 : i32
    return %arg0, %c0_i32 : i32, i32
  }
  func.func @transform_1(%arg0: i32, %arg1: i32) -> (i32, i32) {
    %c0_i32 = arith.constant 0 : i32
    %c0_i32_0 = arith.constant 0 : i32
    return %c0_i32, %arg1 : i32, i32
  }
  func.func @transform_2(%arg0: i32, %arg1: i32) -> (i32, i32) {
    %c0_i32 = arith.constant 0 : i32
    %c0_i32_0 = arith.constant 0 : i32
    return %arg1, %c0_i32 : i32, i32
  }
  func.func @transform_3(%arg0: i32, %arg1: i32) -> (i32, i32) {
    %c0_i32 = arith.constant 0 : i32
    %c0_i32_0 = arith.constant 0 : i32
    return %arg0, %c0_i32 : i32, i32
  }
}

</mosaic_0001>

<llo_original>
// kernel: tpu_custom_call.1
$region0: #{tpu_custom_call.1}
  #allocation0 [shape = 'u32[]', space=smem, size = 0x4, offset = 0x4, fixed_abs, tag = 'smem constant byte address 0x4 - core index']
  #allocation1 [shape = 'u32[144,128]{1,0:T(1,128)}', space=vmem, size = 0x12000, scoped, tag = 'internal scratch']
  %s0 = inlined_call_operand.hbm [shape: f32[16,128], index: 0, kind: input, shape index: {}]
  %s1 = inlined_call_operand.hbm [shape: f32[128,512], index: 1, kind: input, shape index: {}]
  %s2 = inlined_call_operand.hbm [shape: f32[256,128], index: 2, kind: input, shape index: {}]
  %s3 = inlined_call_operand.hbm [shape: f32[16,128], index: 3, kind: output, shape index: {}]
  %s4 = sld [smem:[#allocation0]]
  $region61: #{tpu_custom_call.1} parent=0
    _
  %s6 = ssub.s32 1, %s4
  %s7 = scalar_select 0, %s6, %s4
  $region1: #{tpu_custom_call.1} parent=0
    #allocation2 [shape = 'u8[8192]{0}', space=vmem, size = 0x2000, scoped, tag = 'input window, operand 0']
    #allocation3 [shape = 's32[2]{0}', space=sflag, size = 0x8, scoped, tag = 'scoped memory for tpu_custom_call.1']
    #allocation4 [shape = 's32[2]{0}', space=sflag, size = 0x8, scoped, tag = 'scoped memory for tpu_custom_call.1']
    #allocation5 [shape = 'u8[262144]{0}', space=vmem, size = 0x40000, scoped, tag = 'input window, operand 1, single buffered']
    #allocation6 [shape = 's32[1]{0}', space=sflag, size = 0x4, scoped, tag = 'scoped memory for tpu_custom_call.1']
    #allocation7 [shape = 'u8[131072]{0}', space=vmem, size = 0x20000, scoped, tag = 'input window, operand 2, single buffered']
    #allocation8 [shape = 'u8[8192]{0}', space=vmem, size = 0x2000, scoped, tag = 'output window, operand 0']
    %8 = vsyncpa [#allocation3], 0
    %s9 = scalar_lea.sflag [#allocation3], 1
    %10 = vsyncpa %s9, 0
    %11 = vsyncpa [#allocation6], 0
    %12 = vsyncpa [#allocation4], 0
    %s13 = scalar_lea.sflag [#allocation4], 1
    %14 = vsyncpa %s13, 0
    loop: start=0, step=1, limit=4
    $region2: #{tpu_custom_call.1} parent=1 // loop_pre_header
      _
    $region3: #{tpu_custom_call.1} parent=1 // loop_header
      %s16 = sphi 0, %s20
      %p17 = scmp.ge.s32.totalorder %s16, 4
      %s23 = sphi 0, %s35
      %s24 = sphi 0, %s31
      %s25 = sphi 0, %s23
      %s26 = sphi 0, %s24
      %s27 = sphi 0, %s25
      %s28 = sphi 0, %s26
      %s38 = sphi 0, %s40
      %s41 = sphi 0, %s38
      %s42 = sphi 0, %s41
      %s58 = sphi 0, %s42
      %s64 = sphi 0, %s66
      %s67 = sphi 0, %s64
      %s68 = sphi 0, %s67
      %s84 = sphi 0, %s68
      %s90 = sphi 0, %s92
      %s93 = sphi 0, %s90
      %s94 = sphi 0, %s93
      %s110 = sphi 0, %s94
      %s116 = sphi 0, %s118
      %s119 = sphi 0, %s116
      %s120 = sphi 0, %s119
      %s136 = sphi 0, %s120
    $region4: #{tpu_custom_call.1} parent=1 // loop_header_branch
      %19 = sbr.rel (%p17) target = $region8
    $region5: #{tpu_custom_call.1} parent=1 // loop_body
      %s21 = ssub.s32 %s16, 1
      %s22 = ssub.s32 %s16, 2
      %s29 = sadd.s32 1, %s24
      %p30 = scmp.ge.s32.totalorder %s29, 1
      %s31 = scalar_select %p30, 0, %s29
      %s32 = sadd.s32 1, %s23
      %s33 = scalar_select %p30, %s32, %s23
      %p34 = scmp.ge.s32.totalorder %s33, 2
      %s35 = scalar_select %p34, 0, %s33
      %s36 = ssub.s32 %s23, %s35
      %p37 = scmp.eq.s32.totalorder %s36, 0
      %s39 = sadd.s32 %s38, 1
      %s40 = scalar_select %p37, %s38, %s39
      %p43 = pneg %p37
      %p44 = scmp.eq.s32.totalorder %s16, 1
      %p45 = por %p43, %p44
      %p46 = scmp.ne.s32.totalorder %s38, %s41
      %p47 = scmp.eq.s32.totalorder %s16, 0
      %p48 = por %p46, %p47
      %p49 = scmp.ne.s32.totalorder %s38, %s41
      %p50 = scmp.eq.s32.totalorder %s21, 1
      %p51 = por %p49, %p50
      %p52 = scmp.ne.s32.totalorder %s41, %s42
      %p53 = scmp.eq.s32.totalorder %s21, 0
      %p54 = por %p52, %p53
      %p55 = scmp.ne.s32.totalorder %s41, %s42
      %p56 = scmp.eq.s32.totalorder %s22, 1
      %p57 = por %p55, %p56
      %p59 = scmp.ne.s32.totalorder %s42, %s58
      %p60 = scmp.eq.s32.totalorder %s22, 0
      %p61 = por %p59, %p60
      %s62 = ssub.s32 %s24, %s31
      %p63 = scmp.eq.s32.totalorder %s62, 0
      %s65 = sadd.s32 %s64, 1
      %s66 = scalar_select %p63, %s64, %s65
      %p69 = pneg %p63
      %p70 = scmp.eq.s32.totalorder %s16, 1
      %p71 = por %p69, %p70
      %p72 = scmp.ne.s32.totalorder %s64, %s67
      %p73 = scmp.eq.s32.totalorder %s16, 0
      %p74 = por %p72, %p73
      %p75 = scmp.ne.s32.totalorder %s64, %s67
      %p76 = scmp.eq.s32.totalorder %s21, 1
      %p77 = por %p75, %p76
      %p78 = scmp.ne.s32.totalorder %s67, %s68
      %p79 = scmp.eq.s32.totalorder %s21, 0
      %p80 = por %p78, %p79
      %p81 = scmp.ne.s32.totalorder %s67, %s68
      %p82 = scmp.eq.s32.totalorder %s22, 1
      %p83 = por %p81, %p82
      %p85 = scmp.ne.s32.totalorder %s68, %s84
      %p86 = scmp.eq.s32.totalorder %s22, 0
      %p87 = por %p85, %p86
      %s88 = ssub.s32 %s24, %s31
      %p89 = scmp.eq.s32.totalorder %s88, 0
      %s91 = sadd.s32 %s90, 1
      %s92 = scalar_select %p89, %s90, %s91
      %p95 = pneg %p89
      %p96 = scmp.eq.s32.totalorder %s16, 1
      %p97 = por %p95, %p96
      %p98 = scmp.ne.s32.totalorder %s90, %s93
      %p99 = scmp.eq.s32.totalorder %s16, 0
      %p100 = por %p98, %p99
      %p101 = scmp.ne.s32.totalorder %s90, %s93
      %p102 = scmp.eq.s32.totalorder %s21, 1
      %p103 = por %p101, %p102
      %p104 = scmp.ne.s32.totalorder %s93, %s94
      %p105 = scmp.eq.s32.totalorder %s21, 0
      %p106 = por %p104, %p105
      %p107 = scmp.ne.s32.totalorder %s93, %s94
      %p108 = scmp.eq.s32.totalorder %s22, 1
      %p109 = por %p107, %p108
      %p111 = scmp.ne.s32.totalorder %s94, %s110
      %p112 = scmp.eq.s32.totalorder %s22, 0
      %p113 = por %p111, %p112
      %s114 = ssub.s32 %s23, %s35
      %p115 = scmp.eq.s32.totalorder %s114, 0
      %s117 = sadd.s32 %s116, 1
      %s118 = scalar_select %p115, %s116, %s117
      %p121 = pneg %p115
      %p122 = scmp.eq.s32.totalorder %s16, 1
      %p123 = por %p121, %p122
      %p124 = scmp.ne.s32.totalorder %s116, %s119
      %p125 = scmp.eq.s32.totalorder %s16, 0
      %p126 = por %p124, %p125
      %p127 = scmp.ne.s32.totalorder %s116, %s119
      %p128 = scmp.eq.s32.totalorder %s21, 1
      %p129 = por %p127, %p128
      %p130 = scmp.ne.s32.totalorder %s119, %s120
      %p131 = scmp.eq.s32.totalorder %s21, 0
      %p132 = por %p130, %p131
      %p133 = scmp.ne.s32.totalorder %s119, %s120
      %p134 = scmp.eq.s32.totalorder %s22, 1
      %p135 = por %p133, %p134
      %p137 = scmp.ne.s32.totalorder %s120, %s136
      %p138 = scmp.eq.s32.totalorder %s22, 0
      %p139 = por %p137, %p138
      %p140 = scmp.le.s32.totalorder 1, %s16
      %p141 = scmp.lt.s32.totalorder %s16, 3
      %p142 = pnand %p140, %p141
      %p143 = pneg %p142
      // Predicated region
      $region9: #{tpu_custom_call.1} parent=5 // pred_check
        _
      $region10: #{tpu_custom_call.1} parent=5 // pred_check_branch
        %145 = sbr.rel (%p142) target = $region12
      $region11: #{tpu_custom_call.1} parent=5 // pred_region
        %s146 = ssub.s32 %s16, 1
        // Predicated region
        $region13: #{tpu_custom_call.1} parent=11 // pred_check
          %p147 = pneg %p80
        $region14: #{tpu_custom_call.1} parent=11 // pred_check_branch
          %149 = sbr.rel (%p147) target = $region16
        $region15: #{tpu_custom_call.1} parent=11 // pred_region
          %s150 = smul.u32 4, %s26
          %s152 = ssub.s32 8192, 8192
          %153 = vsyncadd [#allocation6], %s152
          %s154 = smul.addr %s150, 128
          %s155 = scalar_lea.hbm %s1, %s154
          %s156 = sshll.u32 [#allocation5], 4
          %s157 = int_to_ptr.vmem [resolvable:$true] %s156
          %162 = dma.hbm_to_vmem [thread:$0]  %s155, 8192, %s157, [#allocation6], 512, 512, 32
        $region16: #{tpu_custom_call.1} parent=11 // pred_fallthru
          _
        // Predicated region
        $region17: #{tpu_custom_call.1} parent=11 // pred_check
          %p163 = pneg %p106
        $region18: #{tpu_custom_call.1} parent=11 // pred_check_branch
          %165 = sbr.rel (%p163) target = $region20
        $region19: #{tpu_custom_call.1} parent=11 // pred_region
          %s166 = smul.u32 32, %s26
          %s168 = ssub.s32 4096, 4096
          %169 = vsyncadd [#allocation6], %s168
          %s170 = smul.addr %s166, 128
          %s171 = scalar_lea.hbm %s2, %s170
          %s172 = sshll.u32 [#allocation7], 4
          %s173 = int_to_ptr.vmem [resolvable:$true] %s172
          %178 = dma.hbm_to_vmem [thread:$0]  %s171, 4096, %s173, [#allocation6], 128, 128, 8
        $region20: #{tpu_custom_call.1} parent=11 // pred_fallthru
          _
      $region12: #{tpu_custom_call.1} parent=5 // pred_fallthru
        _
      %p179 = scmp.lt.s32.totalorder %s16, 2
      // Predicated region
      $region21: #{tpu_custom_call.1} parent=5 // pred_check
        %p180 = pneg %p179
      $region22: #{tpu_custom_call.1} parent=5 // pred_check_branch
        %182 = sbr.rel (%p180) target = $region24
      $region23: #{tpu_custom_call.1} parent=5 // pred_region
        // Predicated region
        $region25: #{tpu_custom_call.1} parent=23 // pred_check
          %p183 = pneg %p48
        $region26: #{tpu_custom_call.1} parent=23 // pred_check_branch
          %185 = sbr.rel (%p183) target = $region28
        $region27: #{tpu_custom_call.1} parent=23 // pred_region
          %s186 = sand.u32 %s38, 1
          %s187 = scalar_lea.sflag [#allocation3], %s186
          %s188 = sand.u32 %s38, 1
          %s189 = smul.addr %s188, 8
          %s190 = scalar_lea.vmem [#allocation2], %s189
          %s192 = ssub.s32 128, 128
          %193 = vsyncadd %s187, %s192
          %s194 = smul.addr %s23, 128
          %s195 = scalar_lea.hbm %s0, %s194
          %s197 = sshll.u32 %s190, 4
          %s198 = int_to_ptr.vmem [resolvable:$true] %s197
          %200 = dma.hbm_to_vmem [thread:$0]  %s195, 128, %s198, %s187
        $region28: #{tpu_custom_call.1} parent=23 // pred_fallthru
          _
      $region24: #{tpu_custom_call.1} parent=5 // pred_fallthru
        _
      %p201 = scmp.le.s32.totalorder 1, %s16
      %p202 = scmp.lt.s32.totalorder %s16, 3
      %p203 = pnand %p201, %p202
      %p204 = pneg %p203
      // Predicated region
      $region29: #{tpu_custom_call.1} parent=5 // pred_check
        _
      $region30: #{tpu_custom_call.1} parent=5 // pred_check_branch
        %206 = sbr.rel (%p203) target = $region32
      $region31: #{tpu_custom_call.1} parent=5 // pred_region
        %s207 = ssub.s32 %s16, 1
        %s208 = sand.u32 %s41, 1
        %s209 = scalar_lea.sflag [#allocation3], %s208
        %s210 = sand.u32 %s41, 1
        %s211 = smul.addr %s210, 8
        %s212 = scalar_lea.vmem [#allocation2], %s211
        // Predicated region
        $region33: #{tpu_custom_call.1} parent=31 // pred_check
          %p213 = pneg %p54
        $region34: #{tpu_custom_call.1} parent=31 // pred_check_branch
          %215 = sbr.rel (%p213) target = $region36
        $region35: #{tpu_custom_call.1} parent=31 // pred_region
          %216 = dma.done %s209, 128
        $region36: #{tpu_custom_call.1} parent=31 // pred_fallthru
          _
        // Predicated region
        $region37: #{tpu_custom_call.1} parent=31 // pred_check
          %p217 = pneg %p80
        $region38: #{tpu_custom_call.1} parent=31 // pred_check_branch
          %219 = sbr.rel (%p217) target = $region40
        $region39: #{tpu_custom_call.1} parent=31 // pred_region
          %220 = dma.done [#allocation6], 8192
        $region40: #{tpu_custom_call.1} parent=31 // pred_fallthru
          _
        // Predicated region
        $region41: #{tpu_custom_call.1} parent=31 // pred_check
          %p221 = pneg %p106
        $region42: #{tpu_custom_call.1} parent=31 // pred_check_branch
          %223 = sbr.rel (%p221) target = $region44
        $region43: #{tpu_custom_call.1} parent=31 // pred_region
          %224 = dma.done [#allocation6], 4096
        $region44: #{tpu_custom_call.1} parent=31 // pred_fallthru
          _
        %s225 = sand.u32 %s41, 1
        %s226 = scalar_lea.sflag [#allocation3], %s225
        %s227 = sand.u32 %s41, 1
        %s228 = smul.addr %s227, 8
        %s229 = scalar_lea.vmem [#allocation2], %s228
        %p230 = pneg %p54
        %p231 = pneg %p51
        %p232 = pneg %p80
        %p233 = pneg %p77
        %p234 = pneg %p106
        %p235 = pneg %p103
        %p236 = pneg %p132
        %p237 = pneg %p129
        %s238 = sand.u32 %s119, 1
        %s239 = scalar_lea.sflag [#allocation4], %s238
        %s240 = sand.u32 %s119, 1
        %s241 = smul.addr %s240, 8
        %s242 = scalar_lea.vmem [#allocation8], %s241
        %s243 = smul.u32 4, %s26
        %s244 = smul.u32 32, %s26
        %p245 = scmp.eq.s32.totalorder %s26, 0
        // Predicated region
        $region45: #{tpu_custom_call.1} parent=31 // pred_check
          %p246 = pneg %p245
        $region46: #{tpu_custom_call.1} parent=31 // pred_check_branch
          %248 = sbr.rel (%p246) target = $region48
        $region47: #{tpu_custom_call.1} parent=31 // pred_region
          %249 = vst [vmem:[%s242] sm:$0xff] 0.0
        $region48: #{tpu_custom_call.1} parent=31 // pred_fallthru
          _
        %v250 = vld [vmem:[%s242] sm:$0xff]
        %v251 = vld [vmem:[%s212] sm:$0xff]
        %v252 = vld [vmem:[#allocation5] sm:$0xff]
        %v253 = vld [vmem:[#allocation5 + $0x8] sm:$0xff]
        %v254 = vld [vmem:[#allocation5 + $0x10] sm:$0xff]
        %v255 = vld [vmem:[#allocation5 + $0x18] sm:$0xff]
        %v256 = vld [vmem:[#allocation5 + $0x20] sm:$0xff]
        %v257 = vld [vmem:[#allocation5 + $0x28] sm:$0xff]
        %v258 = vld [vmem:[#allocation5 + $0x30] sm:$0xff]
        %v259 = vld [vmem:[#allocation5 + $0x38] sm:$0xff]
        %v260 = vld [vmem:[#allocation5 + $0x40] sm:$0xff]
        %v261 = vld [vmem:[#allocation5 + $0x48] sm:$0xff]
        %v262 = vld [vmem:[#allocation5 + $0x50] sm:$0xff]
        %v263 = vld [vmem:[#allocation5 + $0x58] sm:$0xff]
        %v264 = vld [vmem:[#allocation5 + $0x60] sm:$0xff]
        %v265 = vld [vmem:[#allocation5 + $0x68] sm:$0xff]
        %v266 = vld [vmem:[#allocation5 + $0x70] sm:$0xff]
        %v267 = vld [vmem:[#allocation5 + $0x78] sm:$0xff]
        %v268 = vld [vmem:[#allocation5 + $0x80] sm:$0xff]
        %v269 = vld [vmem:[#allocation5 + $0x88] sm:$0xff]
        %v270 = vld [vmem:[#allocation5 + $0x90] sm:$0xff]
        %v271 = vld [vmem:[#allocation5 + $0x98] sm:$0xff]
        %v272 = vld [vmem:[#allocation5 + $0xa0] sm:$0xff]
        %v273 = vld [vmem:[#allocation5 + $0xa8] sm:$0xff]
        %v274 = vld [vmem:[#allocation5 + $0xb0] sm:$0xff]
        %v275 = vld [vmem:[#allocation5 + $0xb8] sm:$0xff]
        %v276 = vld [vmem:[#allocation5 + $0xc0] sm:$0xff]
        %v277 = vld [vmem:[#allocation5 + $0xc8] sm:$0xff]
        %v278 = vld [vmem:[#allocation5 + $0xd0] sm:$0xff]
        %v279 = vld [vmem:[#allocation5 + $0xd8] sm:$0xff]
        %v280 = vld [vmem:[#allocation5 + $0xe0] sm:$0xff]
        %v281 = vld [vmem:[#allocation5 + $0xe8] sm:$0xff]
        %v282 = vld [vmem:[#allocation5 + $0xf0] sm:$0xff]
        %v283 = vld [vmem:[#allocation5 + $0xf8] sm:$0xff]
        %v284 = vld [vmem:[#allocation5 + $0x100] sm:$0xff]
        %v285 = vld [vmem:[#allocation5 + $0x108] sm:$0xff]
        %v286 = vld [vmem:[#allocation5 + $0x110] sm:$0xff]
        %v287 = vld [vmem:[#allocation5 + $0x118] sm:$0xff]
        %v288 = vld [vmem:[#allocation5 + $0x120] sm:$0xff]
        %v289 = vld [vmem:[#allocation5 + $0x128] sm:$0xff]
        %v290 = vld [vmem:[#allocation5 + $0x130] sm:$0xff]
        %v291 = vld [vmem:[#allocation5 + $0x138] sm:$0xff]
        %v292 = vld [vmem:[#allocation5 + $0x140] sm:$0xff]
        %v293 = vld [vmem:[#allocation5 + $0x148] sm:$0xff]
        %v294 = vld [vmem:[#allocation5 + $0x150] sm:$0xff]
        %v295 = vld [vmem:[#allocation5 + $0x158] sm:$0xff]
        %v296 = vld [vmem:[#allocation5 + $0x160] sm:$0xff]
        %v297 = vld [vmem:[#allocation5 + $0x168] sm:$0xff]
        %v298 = vld [vmem:[#allocation5 + $0x170] sm:$0xff]
        %v299 = vld [vmem:[#allocation5 + $0x178] sm:$0xff]
        %v300 = vld [vmem:[#allocation5 + $0x180] sm:$0xff]
        %v301 = vld [vmem:[#allocation5 + $0x188] sm:$0xff]
        %v302 = vld [vmem:[#allocation5 + $0x190] sm:$0xff]
        %v303 = vld [vmem:[#allocation5 + $0x198] sm:$0xff]
        %v304 = vld [vmem:[#allocation5 + $0x1a0] sm:$0xff]
        %v305 = vld [vmem:[#allocation5 + $0x1a8] sm:$0xff]
        %v306 = vld [vmem:[#allocation5 + $0x1b0] sm:$0xff]
        %v307 = vld [vmem:[#allocation5 + $0x1b8] sm:$0xff]
        %v308 = vld [vmem:[#allocation5 + $0x1c0] sm:$0xff]
        %v309 = vld [vmem:[#allocation5 + $0x1c8] sm:$0xff]
        %v310 = vld [vmem:[#allocation5 + $0x1d0] sm:$0xff]
        %v311 = vld [vmem:[#allocation5 + $0x1d8] sm:$0xff]
        %v312 = vld [vmem:[#allocation5 + $0x1e0] sm:$0xff]
        %v313 = vld [vmem:[#allocation5 + $0x1e8] sm:$0xff]
        %v314 = vld [vmem:[#allocation5 + $0x1f0] sm:$0xff]
        %v315 = vld [vmem:[#allocation5 + $0x1f8] sm:$0xff]
        %316 = vmatprep.subr.mxu0 %v253
        %317 = vmatpush1.msra.mxu0 %v252
        %318 = vmatprep.subr.mxu0 %v257
        %319 = vmatpush1.msra.mxu0 %v256
        %320 = vmatprep.subr.mxu0 %v261
        %321 = vmatpush1.msra.mxu0 %v260
        %322 = vmatprep.subr.mxu0 %v265
        %323 = vmatpush1.msra.mxu0 %v264
        %324 = vmatprep.subr.mxu0 %v269
        %325 = vmatpush1.msra.mxu0 %v268
        %326 = vmatprep.subr.mxu0 %v273
        %327 = vmatpush1.msra.mxu0 %v272
        %328 = vmatprep.subr.mxu0 %v277
        %329 = vmatpush1.msra.mxu0 %v276
        %330 = vmatprep.subr.mxu0 %v281
        %331 = vmatpush1.msra.mxu0 %v280
        %332 = vmatprep.subr.mxu0 %v285
        %333 = vmatpush1.msra.mxu0 %v284
        %334 = vmatprep.subr.mxu0 %v289
        %335 = vmatpush1.msra.mxu0 %v288
        %336 = vmatprep.subr.mxu0 %v293
        %337 = vmatpush1.msra.mxu0 %v292
        %338 = vmatprep.subr.mxu0 %v297
        %339 = vmatpush1.msra.mxu0 %v296
        %340 = vmatprep.subr.mxu0 %v301
        %341 = vmatpush1.msra.mxu0 %v300
        %342 = vmatprep.subr.mxu0 %v305
        %343 = vmatpush1.msra.mxu0 %v304
        %344 = vmatprep.subr.mxu0 %v309
        %345 = vmatpush1.msra.mxu0 %v308
        %346 = vmatprep.subr.mxu0 %v313
        %347 = vmatpush1.msra.mxu0 %v312
        %348 = vmatprep.subr.mxu0 0.0
        %349 = vmatpush1.msra.mxu0 0.0
        %350 = vmatprep.subr.mxu0 0.0
        %351 = vmatpush1.msra.mxu0 0.0
        %352 = vmatprep.subr.mxu0 0.0
        %353 = vmatpush1.msra.mxu0 0.0
        %354 = vmatprep.subr.mxu0 0.0
        %355 = vmatpush1.msra.mxu0 0.0
        %356 = vmatprep.subr.mxu0 0.0
        %357 = vmatpush1.msra.mxu0 0.0
        %358 = vmatprep.subr.mxu0 0.0
        %359 = vmatpush1.msra.mxu0 0.0
        %360 = vmatprep.subr.mxu0 0.0
        %361 = vmatpush1.msra.mxu0 0.0
        %362 = vmatprep.subr.mxu0 0.0
        %363 = vmatpush1.msra.mxu0 0.0
        %364 = vmatprep.subr.mxu0 0.0
        %365 = vmatpush1.msra.mxu0 0.0
        %366 = vmatprep.subr.mxu0 0.0
        %367 = vmatpush1.msra.mxu0 0.0
        %368 = vmatprep.subr.mxu0 0.0
        %369 = vmatpush1.msra.mxu0 0.0
        %370 = vmatprep.subr.mxu0 0.0
        %371 = vmatpush1.msra.mxu0 0.0
        %372 = vmatprep.subr.mxu0 0.0
        %373 = vmatpush1.msra.mxu0 0.0
        %374 = vmatprep.subr.mxu0 0.0
        %375 = vmatpush1.msra.mxu0 0.0
        %376 = vmatprep.subr.mxu0 0.0
        %377 = vmatpush1.msra.mxu0 0.0
        %378 = vmatprep.subr.mxu0 0.0
        %379 = vmatpush1.msra.mxu0 0.0
        %380 = vmatprep.mubr.f32.mxu0 0.0
        %381 = vmatmul.mubr.f32.gmra.mrb[0].mxu0 %v251
        %v382 = vpop.f32.mrb[0].mxu0
        %v383 = vadd.f32 0.0, %v382
        %v384 = vpop.f32.mrb[0].mxu0
        %v385 = vadd.f32 0.0, %v384
        %386 = vdwg.mxu0
        %387 = vmatprep.subr.mxu0 %v255
        %388 = vmatpush1.msra.mxu0 %v254
        %389 = vmatprep.subr.mxu0 %v259
        %390 = vmatpush1.msra.mxu0 %v258
        %391 = vmatprep.subr.mxu0 %v263
        %392 = vmatpush1.msra.mxu0 %v262
        %393 = vmatprep.subr.mxu0 %v267
        %394 = vmatpush1.msra.mxu0 %v266
        %395 = vmatprep.subr.mxu0 %v271
        %396 = vmatpush1.msra.mxu0 %v270
        %397 = vmatprep.subr.mxu0 %v275
        %398 = vmatpush1.msra.mxu0 %v274
        %399 = vmatprep.subr.mxu0 %v279
        %400 = vmatpush1.msra.mxu0 %v278
        %401 = vmatprep.subr.mxu0 %v283
        %402 = vmatpush1.msra.mxu0 %v282
        %403 = vmatprep.subr.mxu0 %v287
        %404 = vmatpush1.msra.mxu0 %v286
        %405 = vmatprep.subr.mxu0 %v291
        %406 = vmatpush1.msra.mxu0 %v290
        %407 = vmatprep.subr.mxu0 %v295
        %408 = vmatpush1.msra.mxu0 %v294
        %409 = vmatprep.subr.mxu0 %v299
        %410 = vmatpush1.msra.mxu0 %v298
        %411 = vmatprep.subr.mxu0 %v303
        %412 = vmatpush1.msra.mxu0 %v302
        %413 = vmatprep.subr.mxu0 %v307
        %414 = vmatpush1.msra.mxu0 %v306
        %415 = vmatprep.subr.mxu0 %v311
        %416 = vmatpush1.msra.mxu0 %v310
        %417 = vmatprep.subr.mxu0 %v315
        %418 = vmatpush1.msra.mxu0 %v314
        %419 = vmatprep.subr.mxu0 0.0
        %420 = vmatpush1.msra.mxu0 0.0
        %421 = vmatprep.subr.mxu0 0.0
        %422 = vmatpush1.msra.mxu0 0.0
        %423 = vmatprep.subr.mxu0 0.0
        %424 = vmatpush1.msra.mxu0 0.0
        %425 = vmatprep.subr.mxu0 0.0
        %426 = vmatpush1.msra.mxu0 0.0
        %427 = vmatprep.subr.mxu0 0.0
        %428 = vmatpush1.msra.mxu0 0.0
        %429 = vmatprep.subr.mxu0 0.0
        %430 = vmatpush1.msra.mxu0 0.0
        %431 = vmatprep.subr.mxu0 0.0
        %432 = vmatpush1.msra.mxu0 0.0
        %433 = vmatprep.subr.mxu0 0.0
        %434 = vmatpush1.msra.mxu0 0.0
        %435 = vmatprep.subr.mxu0 0.0
        %436 = vmatpush1.msra.mxu0 0.0
        %437 = vmatprep.subr.mxu0 0.0
        %438 = vmatpush1.msra.mxu0 0.0
        %439 = vmatprep.subr.mxu0 0.0
        %440 = vmatpush1.msra.mxu0 0.0
        %441 = vmatprep.subr.mxu0 0.0
        %442 = vmatpush1.msra.mxu0 0.0
        %443 = vmatprep.subr.mxu0 0.0
        %444 = vmatpush1.msra.mxu0 0.0
        %445 = vmatprep.subr.mxu0 0.0
        %446 = vmatpush1.msra.mxu0 0.0
        %447 = vmatprep.subr.mxu0 0.0
        %448 = vmatpush1.msra.mxu0 0.0
        %449 = vmatprep.subr.mxu0 0.0
        %450 = vmatpush1.msra.mxu0 0.0
        %451 = vmatprep.mubr.f32.mxu0 0.0
        %452 = vmatmul.mubr.f32.gmra.mrb[0].mxu0 %v251
        %v453 = vpop.f32.mrb[0].mxu0
        %v454 = vadd.f32 0.0, %v453
        %v455 = vpop.f32.mrb[0].mxu0
        %v456 = vadd.f32 0.0, %v455
        %457 = vdwg.mxu0
        %v458 = vmul.f32 %v383, %v454
        %v459 = vmul.f32 %v385, %v456
        %v460 = vxor.u32 %v458, 2147483648
        %v461 = vxor.u32 %v459, 2147483648
        %v462 = vmul.f32 %v460, 1.442695
        %v463 = vpow.pop %v462
        %v464 = vmul.f32 %v461, 1.442695
        %v465 = vpow.pop %v464
        %v466 = vadd.f32 %v463, 1.0
        %v467 = vadd.f32 %v465, 1.0
        %v468 = vrcp.pop %v466
        %v469 = vmul.f32 1.0, %v468
        %v470 = vrcp.pop %v467
        %v471 = vmul.f32 1.0, %v470
        %v472 = vmul.f32 %v458, %v469
        %v473 = vmul.f32 %v459, %v471
        %v474 = vld [vmem:[#allocation7] sm:$0xff]
        %v475 = vld [vmem:[#allocation7 + $0x8] sm:$0xff]
        %v476 = vld [vmem:[#allocation7 + $0x10] sm:$0xff]
        %v477 = vld [vmem:[#allocation7 + $0x18] sm:$0xff]
        %v478 = vld [vmem:[#allocation7 + $0x20] sm:$0xff]
        %v479 = vld [vmem:[#allocation7 + $0x28] sm:$0xff]
        %v480 = vld [vmem:[#allocation7 + $0x30] sm:$0xff]
        %v481 = vld [vmem:[#allocation7 + $0x38] sm:$0xff]
        %v482 = vld [vmem:[#allocation7 + $0x40] sm:$0xff]
        %v483 = vld [vmem:[#allocation7 + $0x48] sm:$0xff]
        %v484 = vld [vmem:[#allocation7 + $0x50] sm:$0xff]
        %v485 = vld [vmem:[#allocation7 + $0x58] sm:$0xff]
        %v486 = vld [vmem:[#allocation7 + $0x60] sm:$0xff]
        %v487 = vld [vmem:[#allocation7 + $0x68] sm:$0xff]
        %v488 = vld [vmem:[#allocation7 + $0x70] sm:$0xff]
        %v489 = vld [vmem:[#allocation7 + $0x78] sm:$0xff]
        %v490 = vld [vmem:[#allocation7 + $0x80] sm:$0xff]
        %v491 = vld [vmem:[#allocation7 + $0x88] sm:$0xff]
        %v492 = vld [vmem:[#allocation7 + $0x90] sm:$0xff]
        %v493 = vld [vmem:[#allocation7 + $0x98] sm:$0xff]
        %v494 = vld [vmem:[#allocation7 + $0xa0] sm:$0xff]
        %v495 = vld [vmem:[#allocation7 + $0xa8] sm:$0xff]
        %v496 = vld [vmem:[#allocation7 + $0xb0] sm:$0xff]
        %v497 = vld [vmem:[#allocation7 + $0xb8] sm:$0xff]
        %v498 = vld [vmem:[#allocation7 + $0xc0] sm:$0xff]
        %v499 = vld [vmem:[#allocation7 + $0xc8] sm:$0xff]
        %v500 = vld [vmem:[#allocation7 + $0xd0] sm:$0xff]
        %v501 = vld [vmem:[#allocation7 + $0xd8] sm:$0xff]
        %v502 = vld [vmem:[#allocation7 + $0xe0] sm:$0xff]
        %v503 = vld [vmem:[#allocation7 + $0xe8] sm:$0xff]
        %v504 = vld [vmem:[#allocation7 + $0xf0] sm:$0xff]
        %v505 = vld [vmem:[#allocation7 + $0xf8] sm:$0xff]
        %506 = vmatprep.subr.mxu0 0.0
        %507 = vmatpush1.msra.mxu0 %v474
        %508 = vmatprep.subr.mxu0 0.0
        %509 = vmatpush1.msra.mxu0 %v475
        %510 = vmatprep.subr.mxu0 0.0
        %511 = vmatpush1.msra.mxu0 %v476
        %512 = vmatprep.subr.mxu0 0.0
        %513 = vmatpush1.msra.mxu0 %v477
        %514 = vmatprep.subr.mxu0 0.0
        %515 = vmatpush1.msra.mxu0 %v478
        %516 = vmatprep.subr.mxu0 0.0
        %517 = vmatpush1.msra.mxu0 %v479
        %518 = vmatprep.subr.mxu0 0.0
        %519 = vmatpush1.msra.mxu0 %v480
        %520 = vmatprep.subr.mxu0 0.0
        %521 = vmatpush1.msra.mxu0 %v481
        %522 = vmatprep.subr.mxu0 0.0
        %523 = vmatpush1.msra.mxu0 %v482
        %524 = vmatprep.subr.mxu0 0.0
        %525 = vmatpush1.msra.mxu0 %v483
        %526 = vmatprep.subr.mxu0 0.0
        %527 = vmatpush1.msra.mxu0 %v484
        %528 = vmatprep.subr.mxu0 0.0
        %529 = vmatpush1.msra.mxu0 %v485
        %530 = vmatprep.subr.mxu0 0.0
        %531 = vmatpush1.msra.mxu0 %v486
        %532 = vmatprep.subr.mxu0 0.0
        %533 = vmatpush1.msra.mxu0 %v487
        %534 = vmatprep.subr.mxu0 0.0
        %535 = vmatpush1.msra.mxu0 %v488
        %536 = vmatprep.subr.mxu0 0.0
        %537 = vmatpush1.msra.mxu0 %v489
        %538 = vmatprep.subr.mxu0 0.0
        %539 = vmatpush1.msra.mxu0 %v490
        %540 = vmatprep.subr.mxu0 0.0
        %541 = vmatpush1.msra.mxu0 %v491
        %542 = vmatprep.subr.mxu0 0.0
        %543 = vmatpush1.msra.mxu0 %v492
        %544 = vmatprep.subr.mxu0 0.0
        %545 = vmatpush1.msra.mxu0 %v493
        %546 = vmatprep.subr.mxu0 0.0
        %547 = vmatpush1.msra.mxu0 %v494
        %548 = vmatprep.subr.mxu0 0.0
        %549 = vmatpush1.msra.mxu0 %v495
        %550 = vmatprep.subr.mxu0 0.0
        %551 = vmatpush1.msra.mxu0 %v496
        %552 = vmatprep.subr.mxu0 0.0
        %553 = vmatpush1.msra.mxu0 %v497
        %554 = vmatprep.subr.mxu0 0.0
        %555 = vmatpush1.msra.mxu0 %v498
        %556 = vmatprep.subr.mxu0 0.0
        %557 = vmatpush1.msra.mxu0 %v499
        %558 = vmatprep.subr.mxu0 0.0
        %559 = vmatpush1.msra.mxu0 %v500
        %560 = vmatprep.subr.mxu0 0.0
        %561 = vmatpush1.msra.mxu0 %v501
        %562 = vmatprep.subr.mxu0 0.0
        %563 = vmatpush1.msra.mxu0 %v502
        %564 = vmatprep.subr.mxu0 0.0
        %565 = vmatpush1.msra.mxu0 %v503
        %566 = vmatprep.subr.mxu0 0.0
        %567 = vmatpush1.msra.mxu0 %v504
        %568 = vmatprep.subr.mxu0 0.0
        %569 = vmatpush1.msra.mxu0 %v505
        %570 = vmatprep.mubr.f32.mxu0 %v473
        %571 = vmatmul.mubr.f32.gmra.mrb[0].mxu0 %v472
        %v572 = vpop.f32.mrb[0].mxu0
        %v573 = vadd.f32 0.0, %v572
        %v574 = vpop.f32.mrb[0].mxu0
        %575 = vdwg.mxu0
        %v576 = vadd.f32 %v250, %v573
        %577 = vst [vmem:[%s242] sm:$0xff] %v576
        %s578 = sand.u32 %s119, 1
        %s579 = scalar_lea.sflag [#allocation4], %s578
        %s580 = sand.u32 %s119, 1
        %s581 = smul.addr %s580, 8
        %s582 = scalar_lea.vmem [#allocation8], %s581
        // Predicated region
        $region49: #{tpu_custom_call.1} parent=31 // pred_check
          %p583 = pneg %p129
        $region50: #{tpu_custom_call.1} parent=31 // pred_check_branch
          %585 = sbr.rel (%p583) target = $region52
        $region51: #{tpu_custom_call.1} parent=31 // pred_region
          %s587 = ssub.s32 128, 128
          %588 = vsyncadd %s579, %s587
          %s589 = smul.addr %s25, 128
          %s590 = scalar_lea.hbm %s3, %s589
          %s592 = sshll.u32 %s582, 4
          %s593 = int_to_ptr.vmem [resolvable:$true] %s592
          %595 = dma.vmem_to_hbm [thread:$0]  %s593, 128, %s590, %s579
        $region52: #{tpu_custom_call.1} parent=31 // pred_fallthru
          _
      $region32: #{tpu_custom_call.1} parent=5 // pred_fallthru
        _
      %p596 = scmp.le.s32.totalorder 2, %s16
      // Predicated region
      $region53: #{tpu_custom_call.1} parent=5 // pred_check
        %p597 = pneg %p596
      $region54: #{tpu_custom_call.1} parent=5 // pred_check_branch
        %599 = sbr.rel (%p597) target = $region56
      $region55: #{tpu_custom_call.1} parent=5 // pred_region
        %s600 = ssub.s32 %s16, 2
        // Predicated region
        $region57: #{tpu_custom_call.1} parent=55 // pred_check
          %p601 = pneg %p135
        $region58: #{tpu_custom_call.1} parent=55 // pred_check_branch
          %603 = sbr.rel (%p601) target = $region60
        $region59: #{tpu_custom_call.1} parent=55 // pred_region
          %s604 = sand.u32 %s120, 1
          %s605 = scalar_lea.sflag [#allocation4], %s604
          %s606 = sand.u32 %s120, 1
          %s607 = smul.addr %s606, 8
          %s608 = scalar_lea.vmem [#allocation8], %s607
          %609 = dma.done %s605, 128
        $region60: #{tpu_custom_call.1} parent=55 // pred_fallthru
          _
      $region56: #{tpu_custom_call.1} parent=5 // pred_fallthru
        _
    $region6: #{tpu_custom_call.1} parent=1 // loop_footer
      %s20 = sadd.s32 1, %s16
    $region7: #{tpu_custom_call.1} parent=1 // loop_footer_branch
      %15 = sbr.rel target = $region3
    $region8: #{tpu_custom_call.1} parent=1 // loop_exit
      _
    %610 = vsyncpa [#allocation3], 1
    %s611 = scalar_lea.sflag [#allocation3], 1
    %612 = vsyncpa %s611, 1
    %613 = vsyncpa [#allocation6], 1
    %614 = vsyncpa [#allocation4], 1
    %s615 = scalar_lea.sflag [#allocation4], 1
    %616 = vsyncpa %s615, 1

</llo_original>
